<compile_context>
chip_gen: v5e
topology: v5e:2x2
jax: 0.10.0
libtpu: 0.0.40
codegen_flags: <defaults>
</compile_context>

<pallas_src>
import jax
import jax.numpy as jnp
from jax.experimental import pallas as pl
from jax.experimental.pallas import tpu as pltpu

LATENT_DIM = 10
H1, H2, H3, OUT = 30, 20, 10, 1
SOFTPLUS_BETA = 3.0
# PyTorch Softplus(beta=3, threshold=20) reverts to identity when beta*x > 20.
# The stable form below already equals x to well within f32 eps in that regime
# (log1p(exp(-20)) ~ 2e-9), so no explicit branch is needed.


def _softplus(v):
    bv = SOFTPLUS_BETA * jnp.abs(v)
    return jnp.maximum(v, 0.0) + (1.0 / SOFTPLUS_BETA) * jnp.log1p(jnp.exp(-bv))


def predictor_kernel(x_ref,
                     w1_ref, b1_ref,
                     w2_ref, b2_ref,
                     w3_ref, b3_ref,
                     w4_ref, b4_ref,
                     out_ref):
    x = x_ref[...]                                                   # (10, TB)

    h = jnp.dot(w1_ref[...], x, preferred_element_type=jnp.float32) + b1_ref[...]
    h = _softplus(h)                                                 # (30, TB)

    h = jnp.dot(w2_ref[...], h, preferred_element_type=jnp.float32) + b2_ref[...]
    h = _softplus(h)                                                 # (20, TB)

    h = jnp.dot(w3_ref[...], h, preferred_element_type=jnp.float32) + b3_ref[...]
    h = _softplus(h)                                                 # (10, TB)

    pred = jnp.dot(w4_ref[...], h, preferred_element_type=jnp.float32) + b4_ref[...]
    out_ref[...] = pred.astype(out_ref.dtype)                        # (1, TB)


def _round_up(n, m):
    return ((n + m - 1) // m) * m


def predictor_forward(x, params, tile_b=2048):
    """x: (batch, LATENT_DIM) f32.  params: (out,in) weights + (out,1) biases.

    Returns (batch, 1) f32 predictions (same orientation as PyTorch).
    """
    batch = x.shape[0]

    # ---- layout plumbing (wrapper side): features->sublanes, batch->lanes ---
    x_t = x.astype(jnp.float32).T                                    # (10, B)
    tb = max(128, (int(tile_b) // 128) * 128)                        # lane-aligned tile
    tb = min(tb, _round_up(batch, 128))
    b_pad = _round_up(batch, tb)
    if b_pad != batch:
        x_t = jnp.pad(x_t, ((0, 0), (0, b_pad - batch)))
    grid = (b_pad // tb,)

    # ---- specs ----
    x_spec = pl.BlockSpec((LATENT_DIM, tb), lambda i: (0, i))
    out_spec = pl.BlockSpec((OUT, tb), lambda i: (0, i))
    const = lambda i: (0, 0)
    w_specs = [
        pl.BlockSpec((H1, LATENT_DIM), const), pl.BlockSpec((H1, 1), const),
        pl.BlockSpec((H2, H1), const),         pl.BlockSpec((H2, 1), const),
        pl.BlockSpec((H3, H2), const),         pl.BlockSpec((H3, 1), const),
        pl.BlockSpec((OUT, H3), const),        pl.BlockSpec((OUT, 1), const),
    ]

    # ---- advisory cost estimate (kernel is tiny and HBM/overhead bound) ----
    flops = 2 * batch * (LATENT_DIM * H1 + H1 * H2 + H2 * H3 + H3 * OUT)
    transcendentals = 2 * batch * (H1 + H2 + H3)          # exp + log1p / element
    weight_bytes = 4 * (H1 * (LATENT_DIM + 1) + H2 * (H1 + 1)
                        + H3 * (H2 + 1) + OUT * (H3 + 1))
    bytes_accessed = 4 * batch * (LATENT_DIM + OUT) + weight_bytes

    out_t = pl.pallas_call(
        predictor_kernel,
        out_shape=jax.ShapeDtypeStruct((OUT, b_pad), jnp.float32),
        grid=grid,
        in_specs=[x_spec] + w_specs,
        out_specs=out_spec,
        compiler_params=pltpu.CompilerParams(
            dimension_semantics=("parallel",)),
        cost_estimate=pl.CostEstimate(
            flops=flops,
            transcendentals=transcendentals,
            bytes_accessed=bytes_accessed),
    )(x_t,
      params["w1"], params["b1"],
      params["w2"], params["b2"],
      params["w3"], params["b3"],
      params["w4"], params["b4"])

    # back to PyTorch orientation: (1, B_pad) -> (B, 1)
    return out_t[:, :batch].T


def init_predictor_params(key):
    """PyTorch-style init: U(-1/sqrt(fan_in), 1/sqrt(fan_in)).

    Weights are kept in nn.Linear's native (out, in) layout; biases are
    (out, 1) so they broadcast along the lane (batch) axis in-kernel.
    """
    dims = [(LATENT_DIM, H1), (H1, H2), (H2, H3), (H3, OUT)]
    params = {}
    for idx, (fan_in, fan_out) in enumerate(dims, start=1):
        key, kw, kb = jax.random.split(key, 3)
        bound = 1.0 / (float(fan_in) ** 0.5)
        params[f"w{idx}"] = jax.random.uniform(
            kw, (fan_out, fan_in), jnp.float32, minval=-bound, maxval=bound)
        params[f"b{idx}"] = jax.random.uniform(
            kb, (fan_out, 1), jnp.float32, minval=-bound, maxval=bound)
    return params


def predictor_reference(x, params):
    """Pure-JAX reference of the same forward pass (also the preferred path
    for tiny batches, where a kernel launch is pure overhead)."""
    h = _softplus(x @ params["w1"].T + params["b1"].T)
    h = _softplus(h @ params["w2"].T + params["b2"].T)
    h = _softplus(h @ params["w3"].T + params["b3"].T)
    return h @ params["w4"].T + params["b4"].T


if __name__ == "__main__":
    key = jax.random.PRNGKey(0)
    key, k_params, k_x = jax.random.split(key, 3)

    params = init_predictor_params(k_params)

    # Small but non-trivial: batch=300 is not a multiple of 128, and with
    # tile_b=128 it exercises padding, a 3-step batch grid and the un-pad slice.
    batch = 300
    x = jax.random.normal(k_x, (batch, LATENT_DIM), dtype=jnp.float32)

    out = predictor_forward(x, params, tile_b=128)
    out = jax.block_until_ready(out)

    ref = predictor_reference(x, params)
    assert out.shape == (batch, OUT)
    assert jnp.allclose(out, ref, atol=1e-4, rtol=1e-4), float(
        jnp.max(jnp.abs(out - ref)))

    print("KERNEL_OK")
</pallas_src>

<mosaic_0001>
module attributes {stable_mosaic.version = 11 : i64} {
  func.func @predictor_kernel(%arg0: i32, %arg1: memref<10x128xf32, #tpu.memory_space<vmem>>, %arg2: memref<30x10xf32, #tpu.memory_space<vmem>>, %arg3: memref<30x1xf32, #tpu.memory_space<vmem>>, %arg4: memref<20x30xf32, #tpu.memory_space<vmem>>, %arg5: memref<20x1xf32, #tpu.memory_space<vmem>>, %arg6: memref<10x20xf32, #tpu.memory_space<vmem>>, %arg7: memref<10x1xf32, #tpu.memory_space<vmem>>, %arg8: memref<1x10xf32, #tpu.memory_space<vmem>>, %arg9: memref<1x1xf32, #tpu.memory_space<vmem>>, %arg10: memref<1x128xf32, #tpu.memory_space<vmem>>) attributes {dimension_semantics = [#tpu.dimension_semantics<parallel>], iteration_bounds = array<i64: 3>, scalar_prefetch = 0 : i64, scratch_operands = 0 : i64, tpu.core_type = #tpu.core_type<tc>, window_params = [{transform_indices = @transform_0, window_bounds = array<i64: 10, 128>}, {pipeline_mode = #tpu.pipeline_mode<synchronous>, transform_indices = @transform_1, window_bounds = array<i64: 30, 10>}, {pipeline_mode = #tpu.pipeline_mode<synchronous>, transform_indices = @transform_2, window_bounds = array<i64: 30, 1>}, {pipeline_mode = #tpu.pipeline_mode<synchronous>, transform_indices = @transform_3, window_bounds = array<i64: 20, 30>}, {pipeline_mode = #tpu.pipeline_mode<synchronous>, transform_indices = @transform_4, window_bounds = array<i64: 20, 1>}, {pipeline_mode = #tpu.pipeline_mode<synchronous>, transform_indices = @transform_5, window_bounds = array<i64: 10, 20>}, {pipeline_mode = #tpu.pipeline_mode<synchronous>, transform_indices = @transform_6, window_bounds = array<i64: 10, 1>}, {pipeline_mode = #tpu.pipeline_mode<synchronous>, transform_indices = @transform_7, window_bounds = array<i64: 1, 10>}, {pipeline_mode = #tpu.pipeline_mode<synchronous>, transform_indices = @transform_8, window_bounds = array<i64: 1, 1>}, {transform_indices = @transform_9, window_bounds = array<i64: 1, 128>}]} {
    %c0 = arith.constant 0 : index
    %c0_0 = arith.constant 0 : index
    %0 = vector.load %arg1[%c0, %c0_0] : memref<10x128xf32, #tpu.memory_space<vmem>>, vector<10x128xf32>
    %c0_1 = arith.constant 0 : index
    %c0_2 = arith.constant 0 : index
    %1 = vector.load %arg2[%c0_1, %c0_2] : memref<30x10xf32, #tpu.memory_space<vmem>>, vector<30x10xf32>
    %cst = arith.constant dense<0.000000e+00> : vector<30x128xf32>
    %2 = tpu.matmul %1, %0, %cst {dimension_numbers = #tpu.dot_dimension_numbers<[1], [0], [0], [1], [0, 0, 1, 1], [], []>} : vector<30x10xf32>, vector<10x128xf32>, vector<30x128xf32> -> vector<30x128xf32>
    %c0_3 = arith.constant 0 : index
    %c0_4 = arith.constant 0 : index
    %3 = vector.load %arg3[%c0_3, %c0_4] : memref<30x1xf32, #tpu.memory_space<vmem>>, vector<30x1xf32>
    %4 = vector.broadcast %3 : vector<30x1xf32> to vector<30x128xf32>
    %5 = arith.addf %2, %4 : vector<30x128xf32>
    %6 = math.absf %5 : vector<30x128xf32>
    %cst_5 = arith.constant 3.000000e+00 : f32
    %7 = vector.broadcast %cst_5 : f32 to vector<30x128xf32>
    %8 = arith.mulf %7, %6 : vector<30x128xf32>
    %cst_6 = arith.constant 0.000000e+00 : f32
    %9 = vector.broadcast %cst_6 : f32 to vector<30x128xf32>
    %10 = arith.maximumf %5, %9 : vector<30x128xf32>
    %cst_7 = arith.constant 0.000000e+00 : f32
    %11 = vector.broadcast %cst_7 : f32 to vector<30x128xf32>
    %12 = arith.subf %11, %8 : vector<30x128xf32>
    %13 = math.exp %12 : vector<30x128xf32>
    %14 = math.log1p %13 : vector<30x128xf32>
    %cst_8 = arith.constant 0.333333343 : f32
    %15 = vector.broadcast %cst_8 : f32 to vector<30x128xf32>
    %16 = arith.mulf %15, %14 : vector<30x128xf32>
    %17 = arith.addf %10, %16 : vector<30x128xf32>
    %c0_9 = arith.constant 0 : index
    %c0_10 = arith.constant 0 : index
    %18 = vector.load %arg4[%c0_9, %c0_10] : memref<20x30xf32, #tpu.memory_space<vmem>>, vector<20x30xf32>
    %cst_11 = arith.constant dense<0.000000e+00> : vector<20x128xf32>
    %19 = tpu.matmul %18, %17, %cst_11 {dimension_numbers = #tpu.dot_dimension_numbers<[1], [0], [0], [1], [0, 0, 1, 1], [], []>} : vector<20x30xf32>, vector<30x128xf32>, vector<20x128xf32> -> vector<20x128xf32>
    %c0_12 = arith.constant 0 : index
    %c0_13 = arith.constant 0 : index
    %20 = vector.load %arg5[%c0_12, %c0_13] : memref<20x1xf32, #tpu.memory_space<vmem>>, vector<20x1xf32>
    %21 = vector.broadcast %20 : vector<20x1xf32> to vector<20x128xf32>
    %22 = arith.addf %19, %21 : vector<20x128xf32>
    %23 = math.absf %22 : vector<20x128xf32>
    %cst_14 = arith.constant 3.000000e+00 : f32
    %24 = vector.broadcast %cst_14 : f32 to vector<20x128xf32>
    %25 = arith.mulf %24, %23 : vector<20x128xf32>
    %cst_15 = arith.constant 0.000000e+00 : f32
    %26 = vector.broadcast %cst_15 : f32 to vector<20x128xf32>
    %27 = arith.maximumf %22, %26 : vector<20x128xf32>
    %cst_16 = arith.constant 0.000000e+00 : f32
    %28 = vector.broadcast %cst_16 : f32 to vector<20x128xf32>
    %29 = arith.subf %28, %25 : vector<20x128xf32>
    %30 = math.exp %29 : vector<20x128xf32>
    %31 = math.log1p %30 : vector<20x128xf32>
    %cst_17 = arith.constant 0.333333343 : f32
    %32 = vector.broadcast %cst_17 : f32 to vector<20x128xf32>
    %33 = arith.mulf %32, %31 : vector<20x128xf32>
    %34 = arith.addf %27, %33 : vector<20x128xf32>
    %c0_18 = arith.constant 0 : index
    %c0_19 = arith.constant 0 : index
    %35 = vector.load %arg6[%c0_18, %c0_19] : memref<10x20xf32, #tpu.memory_space<vmem>>, vector<10x20xf32>
    %cst_20 = arith.constant dense<0.000000e+00> : vector<10x128xf32>
    %36 = tpu.matmul %35, %34, %cst_20 {dimension_numbers = #tpu.dot_dimension_numbers<[1], [0], [0], [1], [0, 0, 1, 1], [], []>} : vector<10x20xf32>, vector<20x128xf32>, vector<10x128xf32> -> vector<10x128xf32>
    %c0_21 = arith.constant 0 : index
    %c0_22 = arith.constant 0 : index
    %37 = vector.load %arg7[%c0_21, %c0_22] : memref<10x1xf32, #tpu.memory_space<vmem>>, vector<10x1xf32>
    %38 = vector.broadcast %37 : vector<10x1xf32> to vector<10x128xf32>
    %39 = arith.addf %36, %38 : vector<10x128xf32>
    %40 = math.absf %39 : vector<10x128xf32>
    %cst_23 = arith.constant 3.000000e+00 : f32
    %41 = vector.broadcast %cst_23 : f32 to vector<10x128xf32>
    %42 = arith.mulf %41, %40 : vector<10x128xf32>
    %cst_24 = arith.constant 0.000000e+00 : f32
    %43 = vector.broadcast %cst_24 : f32 to vector<10x128xf32>
    %44 = arith.maximumf %39, %43 : vector<10x128xf32>
    %cst_25 = arith.constant 0.000000e+00 : f32
    %45 = vector.broadcast %cst_25 : f32 to vector<10x128xf32>
    %46 = arith.subf %45, %42 : vector<10x128xf32>
    %47 = math.exp %46 : vector<10x128xf32>
    %48 = math.log1p %47 : vector<10x128xf32>
    %cst_26 = arith.constant 0.333333343 : f32
    %49 = vector.broadcast %cst_26 : f32 to vector<10x128xf32>
    %50 = arith.mulf %49, %48 : vector<10x128xf32>
    %51 = arith.addf %44, %50 : vector<10x128xf32>
    %c0_27 = arith.constant 0 : index
    %c0_28 = arith.constant 0 : index
    %52 = vector.load %arg8[%c0_27, %c0_28] : memref<1x10xf32, #tpu.memory_space<vmem>>, vector<1x10xf32>
    %cst_29 = arith.constant dense<0.000000e+00> : vector<1x128xf32>
    %53 = tpu.matmul %52, %51, %cst_29 {dimension_numbers = #tpu.dot_dimension_numbers<[1], [0], [0], [1], [0, 0, 1, 1], [], []>} : vector<1x10xf32>, vector<10x128xf32>, vector<1x128xf32> -> vector<1x128xf32>
    %c0_30 = arith.constant 0 : index
    %c0_31 = arith.constant 0 : index
    %54 = vector.load %arg9[%c0_30, %c0_31] : memref<1x1xf32, #tpu.memory_space<vmem>>, vector<1x1xf32>
    %55 = vector.broadcast %54 : vector<1x1xf32> to vector<1x128xf32>
    %56 = arith.addf %53, %55 : vector<1x128xf32>
    %c0_32 = arith.constant 0 : index
    %c0_33 = arith.constant 0 : index
    %57 = vector.load %arg10[%c0_32, %c0_33] : memref<1x128xf32, #tpu.memory_space<vmem>>, vector<1x128xf32>
    tpu.vector_store %arg10[%c0_32, %c0_33], %56 {strides = array<i32>} : memref<1x128xf32, #tpu.memory_space<vmem>>, vector<1x128xf32>,
    return
  }
  func.func @transform_0(%arg0: i32) -> (i32, i32) {
    %c0_i32 = arith.constant 0 : i32
    %c0_i32_0 = arith.constant 0 : i32
    return %c0_i32, %arg0 : i32, i32
  }
  func.func @transform_1(%arg0: i32) -> (i32, i32) {
    %c0_i32 = arith.constant 0 : i32
    %c0_i32_0 = arith.constant 0 : i32
    %c0_i32_1 = arith.constant 0 : i32
    return %c0_i32, %c0_i32_0 : i32, i32
  }
  func.func @transform_2(%arg0: i32) -> (i32, i32) {
    %c0_i32 = arith.constant 0 : i32
    %c0_i32_0 = arith.constant 0 : i32
    %c0_i32_1 = arith.constant 0 : i32
    return %c0_i32, %c0_i32_0 : i32, i32
  }
  func.func @transform_3(%arg0: i32) -> (i32, i32) {
    %c0_i32 = arith.constant 0 : i32
    %c0_i32_0 = arith.constant 0 : i32
    %c0_i32_1 = arith.constant 0 : i32
    return %c0_i32, %c0_i32_0 : i32, i32
  }
  func.func @transform_4(%arg0: i32) -> (i32, i32) {
    %c0_i32 = arith.constant 0 : i32
    %c0_i32_0 = arith.constant 0 : i32
    %c0_i32_1 = arith.constant 0 : i32
    return %c0_i32, %c0_i32_0 : i32, i32
  }
  func.func @transform_5(%arg0: i32) -> (i32, i32) {
    %c0_i32 = arith.constant 0 : i32
    %c0_i32_0 = arith.constant 0 : i32
    %c0_i32_1 = arith.constant 0 : i32
    return %c0_i32, %c0_i32_0 : i32, i32
  }
  func.func @transform_6(%arg0: i32) -> (i32, i32) {
    %c0_i32 = arith.constant 0 : i32
    %c0_i32_0 = arith.constant 0 : i32
    %c0_i32_1 = arith.constant 0 : i32
    return %c0_i32, %c0_i32_0 : i32, i32
  }
  func.func @transform_7(%arg0: i32) -> (i32, i32) {
    %c0_i32 = arith.constant 0 : i32
    %c0_i32_0 = arith.constant 0 : i32
    %c0_i32_1 = arith.constant 0 : i32
    return %c0_i32, %c0_i32_0 : i32, i32
  }
  func.func @transform_8(%arg0: i32) -> (i32, i32) {
    %c0_i32 = arith.constant 0 : i32
    %c0_i32_0 = arith.constant 0 : i32
    %c0_i32_1 = arith.constant 0 : i32
    return %c0_i32, %c0_i32_0 : i32, i32
  }
  func.func @transform_9(%arg0: i32) -> (i32, i32) {
    %c0_i32 = arith.constant 0 : i32
    %c0_i32_0 = arith.constant 0 : i32
    return %c0_i32, %arg0 : i32, i32
  }
}

</mosaic_0001>

<llo_original>
// kernel: tpu_custom_call.1
$region0: #{tpu_custom_call.1}
  #allocation0 [shape = 'u32[]', space=smem, size = 0x4, offset = 0x4, fixed_abs, tag = 'smem constant byte address 0x4 - core index']
  #allocation1 [shape = 'u32[72,128]{1,0:T(1,128)}', space=vmem, size = 0x9000, scoped, tag = 'internal scratch']
  #allocation2 [shape = 'f32[1,1]{1,0:T(1,128)S(1)}', space=vmem, size = 0x200, scoped, tag = 'scoped memory for tpu_custom_call.1']
  %s0 = inlined_call_operand.vmem [shape: f32[10,384], index: 0, kind: input, shape index: {}]
  %s1 = inlined_call_operand.vmem [shape: f32[30,10], index: 1, kind: input, shape index: {}]
  %s2 = inlined_call_operand.vmem [shape: f32[30,1], index: 2, kind: input, shape index: {}]
  %s3 = inlined_call_operand.vmem [shape: f32[20,30], index: 3, kind: input, shape index: {}]
  %s4 = inlined_call_operand.vmem [shape: f32[20,1], index: 4, kind: input, shape index: {}]
  %s5 = inlined_call_operand.vmem [shape: f32[10,20], index: 5, kind: input, shape index: {}]
  %s6 = inlined_call_operand.vmem [shape: f32[10,1], index: 6, kind: input, shape index: {}]
  %s7 = inlined_call_operand.vmem [shape: f32[1,10], index: 7, kind: input, shape index: {}]
  %s8 = inlined_call_operand.<no memory space> [shape: f32[1,1], index: 8, kind: input, shape index: {}]
  %s9 = inlined_call_operand.hbm [shape: f32[1,384], index: 9, kind: output, shape index: {}]
  %s10 = sld [smem:[#allocation0]]
  $region107: #{tpu_custom_call.1} parent=0
    _
  %s12 = ssub.s32 1, %s10
  %s13 = scalar_select 0, %s12, %s10
  %v14 = vstv %s8
  %15 = vst [vmem:[#allocation2] sm:$0x1] %v14
  $region1: #{tpu_custom_call.1} parent=0
    #allocation3 [shape = 'u8[16384]{0}', space=vmem, size = 0x4000, scoped, tag = 'input window, operand 0']
    #allocation4 [shape = 'u8[1024]{0}', space=vmem, size = 0x400, scoped, tag = 'output window, operand 0']
    #allocation5 [shape = 's32[2]{0}', space=sflag, size = 0x8, scoped, tag = 'scoped memory for tpu_custom_call.1']
    %16 = vsyncpa [#allocation5], 0
    %s17 = scalar_lea.sflag [#allocation5], 1
    %18 = vsyncpa %s17, 0
    loop: start=0, step=1, limit=5
    $region2: #{tpu_custom_call.1} parent=1 // loop_pre_header
      _
    $region3: #{tpu_custom_call.1} parent=1 // loop_header
      %s20 = sphi 0, %s24
      %p21 = scmp.ge.s32.totalorder %s20, 5
      %s30 = sphi 0, %s32
      %s33 = sphi 0, %s30
      %s34 = sphi 0, %s33
      %s50 = sphi 0, %s34
      %s54 = sphi 0, %s54
      %s56 = sphi 0, %s54
      %s57 = sphi 0, %s56
      %s71 = sphi 0, %s57
      %s75 = sphi 0, %s75
      %s77 = sphi 0, %s75
      %s78 = sphi 0, %s77
      %s92 = sphi 0, %s78
      %s96 = sphi 0, %s96
      %s98 = sphi 0, %s96
      %s99 = sphi 0, %s98
      %s113 = sphi 0, %s99
      %s117 = sphi 0, %s117
      %s119 = sphi 0, %s117
      %s120 = sphi 0, %s119
      %s134 = sphi 0, %s120
      %s138 = sphi 0, %s138
      %s140 = sphi 0, %s138
      %s141 = sphi 0, %s140
      %s155 = sphi 0, %s141
      %s159 = sphi 0, %s159
      %s161 = sphi 0, %s159
      %s162 = sphi 0, %s161
      %s176 = sphi 0, %s162
      %s180 = sphi 0, %s180
      %s182 = sphi 0, %s180
      %s183 = sphi 0, %s182
      %s197 = sphi 0, %s183
      %s201 = sphi 0, %s201
      %s203 = sphi 0, %s201
      %s204 = sphi 0, %s203
      %s218 = sphi 0, %s204
      %s224 = sphi 0, %s226
      %s227 = sphi 0, %s224
      %s228 = sphi 0, %s227
      %s244 = sphi 0, %s228
    $region4: #{tpu_custom_call.1} parent=1 // loop_header_branch
      %23 = sbr.rel (%p21) target = $region8
    $region5: #{tpu_custom_call.1} parent=1 // loop_body
      %s25 = ssub.s32 %s20, 1
      %s26 = ssub.s32 %s20, 2
      %s27 = sadd.s32 %s20, 1
      %s28 = ssub.s32 %s20, %s27
      %p29 = scmp.eq.s32.totalorder %s28, 0
      %s31 = sadd.s32 %s30, 1
      %s32 = scalar_select %p29, %s30, %s31
      %p35 = pneg %p29
      %p36 = scmp.eq.s32.totalorder %s20, 2
      %p37 = por %p35, %p36
      %p38 = scmp.ne.s32.totalorder %s30, %s33
      %p39 = scmp.eq.s32.totalorder %s20, 0
      %p40 = por %p38, %p39
      %p41 = scmp.ne.s32.totalorder %s30, %s33
      %p42 = scmp.eq.s32.totalorder %s25, 2
      %p43 = por %p41, %p42
      %p44 = scmp.ne.s32.totalorder %s33, %s34
      %p45 = scmp.eq.s32.totalorder %s25, 0
      %p46 = por %p44, %p45
      %p47 = scmp.ne.s32.totalorder %s33, %s34
      %p48 = scmp.eq.s32.totalorder %s26, 2
      %p49 = por %p47, %p48
      %p51 = scmp.ne.s32.totalorder %s34, %s50
      %p52 = scmp.eq.s32.totalorder %s26, 0
      %p53 = por %p51, %p52
      %s55 = sadd.s32 %s54, 1
      %p58 = scmp.eq.s32.totalorder %s20, 2
      %p59 = scmp.ne.s32.totalorder %s54, %s56
      %p60 = scmp.eq.s32.totalorder %s20, 0
      %p61 = por %p59, %p60
      %p62 = scmp.ne.s32.totalorder %s54, %s56
      %p63 = scmp.eq.s32.totalorder %s25, 2
      %p64 = por %p62, %p63
      %p65 = scmp.ne.s32.totalorder %s56, %s57
      %p66 = scmp.eq.s32.totalorder %s25, 0
      %p67 = por %p65, %p66
      %p68 = scmp.ne.s32.totalorder %s56, %s57
      %p69 = scmp.eq.s32.totalorder %s26, 2
      %p70 = por %p68, %p69
      %p72 = scmp.ne.s32.totalorder %s57, %s71
      %p73 = scmp.eq.s32.totalorder %s26, 0
      %p74 = por %p72, %p73
      %s76 = sadd.s32 %s75, 1
      %p79 = scmp.eq.s32.totalorder %s20, 2
      %p80 = scmp.ne.s32.totalorder %s75, %s77
      %p81 = scmp.eq.s32.totalorder %s20, 0
      %p82 = por %p80, %p81
      %p83 = scmp.ne.s32.totalorder %s75, %s77
      %p84 = scmp.eq.s32.totalorder %s25, 2
      %p85 = por %p83, %p84
      %p86 = scmp.ne.s32.totalorder %s77, %s78
      %p87 = scmp.eq.s32.totalorder %s25, 0
      %p88 = por %p86, %p87
      %p89 = scmp.ne.s32.totalorder %s77, %s78
      %p90 = scmp.eq.s32.totalorder %s26, 2
      %p91 = por %p89, %p90
      %p93 = scmp.ne.s32.totalorder %s78, %s92
      %p94 = scmp.eq.s32.totalorder %s26, 0
      %p95 = por %p93, %p94
      %s97 = sadd.s32 %s96, 1
      %p100 = scmp.eq.s32.totalorder %s20, 2
      %p101 = scmp.ne.s32.totalorder %s96, %s98
      %p102 = scmp.eq.s32.totalorder %s20, 0
      %p103 = por %p101, %p102
      %p104 = scmp.ne.s32.totalorder %s96, %s98
      %p105 = scmp.eq.s32.totalorder %s25, 2
      %p106 = por %p104, %p105
      %p107 = scmp.ne.s32.totalorder %s98, %s99
      %p108 = scmp.eq.s32.totalorder %s25, 0
      %p109 = por %p107, %p108
      %p110 = scmp.ne.s32.totalorder %s98, %s99
      %p111 = scmp.eq.s32.totalorder %s26, 2
      %p112 = por %p110, %p111
      %p114 = scmp.ne.s32.totalorder %s99, %s113
      %p115 = scmp.eq.s32.totalorder %s26, 0
      %p116 = por %p114, %p115
      %s118 = sadd.s32 %s117, 1
      %p121 = scmp.eq.s32.totalorder %s20, 2
      %p122 = scmp.ne.s32.totalorder %s117, %s119
      %p123 = scmp.eq.s32.totalorder %s20, 0
      %p124 = por %p122, %p123
      %p125 = scmp.ne.s32.totalorder %s117, %s119
      %p126 = scmp.eq.s32.totalorder %s25, 2
      %p127 = por %p125, %p126
      %p128 = scmp.ne.s32.totalorder %s119, %s120
      %p129 = scmp.eq.s32.totalorder %s25, 0
      %p130 = por %p128, %p129
      %p131 = scmp.ne.s32.totalorder %s119, %s120
      %p132 = scmp.eq.s32.totalorder %s26, 2
      %p133 = por %p131, %p132
      %p135 = scmp.ne.s32.totalorder %s120, %s134
      %p136 = scmp.eq.s32.totalorder %s26, 0
      %p137 = por %p135, %p136
      %s139 = sadd.s32 %s138, 1
      %p142 = scmp.eq.s32.totalorder %s20, 2
      %p143 = scmp.ne.s32.totalorder %s138, %s140
      %p144 = scmp.eq.s32.totalorder %s20, 0
      %p145 = por %p143, %p144
      %p146 = scmp.ne.s32.totalorder %s138, %s140
      %p147 = scmp.eq.s32.totalorder %s25, 2
      %p148 = por %p146, %p147
      %p149 = scmp.ne.s32.totalorder %s140, %s141
      %p150 = scmp.eq.s32.totalorder %s25, 0
      %p151 = por %p149, %p150
      %p152 = scmp.ne.s32.totalorder %s140, %s141
      %p153 = scmp.eq.s32.totalorder %s26, 2
      %p154 = por %p152, %p153
      %p156 = scmp.ne.s32.totalorder %s141, %s155
      %p157 = scmp.eq.s32.totalorder %s26, 0
      %p158 = por %p156, %p157
      %s160 = sadd.s32 %s159, 1
      %p163 = scmp.eq.s32.totalorder %s20, 2
      %p164 = scmp.ne.s32.totalorder %s159, %s161
      %p165 = scmp.eq.s32.totalorder %s20, 0
      %p166 = por %p164, %p165
      %p167 = scmp.ne.s32.totalorder %s159, %s161
      %p168 = scmp.eq.s32.totalorder %s25, 2
      %p169 = por %p167, %p168
      %p170 = scmp.ne.s32.totalorder %s161, %s162
      %p171 = scmp.eq.s32.totalorder %s25, 0
      %p172 = por %p170, %p171
      %p173 = scmp.ne.s32.totalorder %s161, %s162
      %p174 = scmp.eq.s32.totalorder %s26, 2
      %p175 = por %p173, %p174
      %p177 = scmp.ne.s32.totalorder %s162, %s176
      %p178 = scmp.eq.s32.totalorder %s26, 0
      %p179 = por %p177, %p178
      %s181 = sadd.s32 %s180, 1
      %p184 = scmp.eq.s32.totalorder %s20, 2
      %p185 = scmp.ne.s32.totalorder %s180, %s182
      %p186 = scmp.eq.s32.totalorder %s20, 0
      %p187 = por %p185, %p186
      %p188 = scmp.ne.s32.totalorder %s180, %s182
      %p189 = scmp.eq.s32.totalorder %s25, 2
      %p190 = por %p188, %p189
      %p191 = scmp.ne.s32.totalorder %s182, %s183
      %p192 = scmp.eq.s32.totalorder %s25, 0
      %p193 = por %p191, %p192
      %p194 = scmp.ne.s32.totalorder %s182, %s183
      %p195 = scmp.eq.s32.totalorder %s26, 2
      %p196 = por %p194, %p195
      %p198 = scmp.ne.s32.totalorder %s183, %s197
      %p199 = scmp.eq.s32.totalorder %s26, 0
      %p200 = por %p198, %p199
      %s202 = sadd.s32 %s201, 1
      %p205 = scmp.eq.s32.totalorder %s20, 2
      %p206 = scmp.ne.s32.totalorder %s201, %s203
      %p207 = scmp.eq.s32.totalorder %s20, 0
      %p208 = por %p206, %p207
      %p209 = scmp.ne.s32.totalorder %s201, %s203
      %p210 = scmp.eq.s32.totalorder %s25, 2
      %p211 = por %p209, %p210
      %p212 = scmp.ne.s32.totalorder %s203, %s204
      %p213 = scmp.eq.s32.totalorder %s25, 0
      %p214 = por %p212, %p213
      %p215 = scmp.ne.s32.totalorder %s203, %s204
      %p216 = scmp.eq.s32.totalorder %s26, 2
      %p217 = por %p215, %p216
      %p219 = scmp.ne.s32.totalorder %s204, %s218
      %p220 = scmp.eq.s32.totalorder %s26, 0
      %p221 = por %p219, %p220
      %s222 = ssub.s32 %s20, %s27
      %p223 = scmp.eq.s32.totalorder %s222, 0
      %s225 = sadd.s32 %s224, 1
      %s226 = scalar_select %p223, %s224, %s225
      %p229 = pneg %p223
      %p230 = scmp.eq.s32.totalorder %s20, 2
      %p231 = por %p229, %p230
      %p232 = scmp.ne.s32.totalorder %s224, %s227
      %p233 = scmp.eq.s32.totalorder %s20, 0
      %p234 = por %p232, %p233
      %p235 = scmp.ne.s32.totalorder %s224, %s227
      %p236 = scmp.eq.s32.totalorder %s25, 2
      %p237 = por %p235, %p236
      %p238 = scmp.ne.s32.totalorder %s227, %s228
      %p239 = scmp.eq.s32.totalorder %s25, 0
      %p240 = por %p238, %p239
      %p241 = scmp.ne.s32.totalorder %s227, %s228
      %p242 = scmp.eq.s32.totalorder %s26, 2
      %p243 = por %p241, %p242
      %p245 = scmp.ne.s32.totalorder %s228, %s244
      %p246 = scmp.eq.s32.totalorder %s26, 0
      %p247 = por %p245, %p246
      %p248 = scmp.le.s32.totalorder 1, %s20
      %p249 = scmp.lt.s32.totalorder %s20, 4
      %p250 = pnand %p248, %p249
      %p251 = pneg %p250
      // Predicated region
      $region9: #{tpu_custom_call.1} parent=5 // pred_check
        _
      $region10: #{tpu_custom_call.1} parent=5 // pred_check_branch
        %253 = sbr.rel (%p250) target = $region12
      $region11: #{tpu_custom_call.1} parent=5 // pred_region
        %s254 = ssub.s32 %s20, 1
        // Predicated region
        $region13: #{tpu_custom_call.1} parent=11 // pred_check
          %p255 = pneg %p67
        $region14: #{tpu_custom_call.1} parent=11 // pred_check_branch
          %257 = sbr.rel (%p255) target = $region16
        $region15: #{tpu_custom_call.1} parent=11 // pred_region
          _
        $region16: #{tpu_custom_call.1} parent=11 // pred_fallthru
          _
        // Predicated region
        $region17: #{tpu_custom_call.1} parent=11 // pred_check
          %p258 = pneg %p88
        $region18: #{tpu_custom_call.1} parent=11 // pred_check_branch
          %260 = sbr.rel (%p258) target = $region20
        $region19: #{tpu_custom_call.1} parent=11 // pred_region
          _
        $region20: #{tpu_custom_call.1} parent=11 // pred_fallthru
          _
        // Predicated region
        $region21: #{tpu_custom_call.1} parent=11 // pred_check
          %p261 = pneg %p109
        $region22: #{tpu_custom_call.1} parent=11 // pred_check_branch
          %263 = sbr.rel (%p261) target = $region24
        $region23: #{tpu_custom_call.1} parent=11 // pred_region
          _
        $region24: #{tpu_custom_call.1} parent=11 // pred_fallthru
          _
        // Predicated region
        $region25: #{tpu_custom_call.1} parent=11 // pred_check
          %p264 = pneg %p130
        $region26: #{tpu_custom_call.1} parent=11 // pred_check_branch
          %266 = sbr.rel (%p264) target = $region28
        $region27: #{tpu_custom_call.1} parent=11 // pred_region
          _
        $region28: #{tpu_custom_call.1} parent=11 // pred_fallthru
          _
        // Predicated region
        $region29: #{tpu_custom_call.1} parent=11 // pred_check
          %p267 = pneg %p151
        $region30: #{tpu_custom_call.1} parent=11 // pred_check_branch
          %269 = sbr.rel (%p267) target = $region32
        $region31: #{tpu_custom_call.1} parent=11 // pred_region
          _
        $region32: #{tpu_custom_call.1} parent=11 // pred_fallthru
          _
        // Predicated region
        $region33: #{tpu_custom_call.1} parent=11 // pred_check
          %p270 = pneg %p172
        $region34: #{tpu_custom_call.1} parent=11 // pred_check_branch
          %272 = sbr.rel (%p270) target = $region36
        $region35: #{tpu_custom_call.1} parent=11 // pred_region
          _
        $region36: #{tpu_custom_call.1} parent=11 // pred_fallthru
          _
        // Predicated region
        $region37: #{tpu_custom_call.1} parent=11 // pred_check
          %p273 = pneg %p193
        $region38: #{tpu_custom_call.1} parent=11 // pred_check_branch
          %275 = sbr.rel (%p273) target = $region40
        $region39: #{tpu_custom_call.1} parent=11 // pred_region
          _
        $region40: #{tpu_custom_call.1} parent=11 // pred_fallthru
          _
        // Predicated region
        $region41: #{tpu_custom_call.1} parent=11 // pred_check
          %p276 = pneg %p214
        $region42: #{tpu_custom_call.1} parent=11 // pred_check_branch
          %278 = sbr.rel (%p276) target = $region44
        $region43: #{tpu_custom_call.1} parent=11 // pred_region
          _
        $region44: #{tpu_custom_call.1} parent=11 // pred_fallthru
          _
      $region12: #{tpu_custom_call.1} parent=5 // pred_fallthru
        _
      %p279 = scmp.lt.s32.totalorder %s20, 3
      // Predicated region
      $region45: #{tpu_custom_call.1} parent=5 // pred_check
        %p280 = pneg %p279
      $region46: #{tpu_custom_call.1} parent=5 // pred_check_branch
        %282 = sbr.rel (%p280) target = $region48
      $region47: #{tpu_custom_call.1} parent=5 // pred_region
        // Predicated region
        $region49: #{tpu_custom_call.1} parent=47 // pred_check
          %p283 = pneg %p40
        $region50: #{tpu_custom_call.1} parent=47 // pred_check_branch
          %285 = sbr.rel (%p283) target = $region52
        $region51: #{tpu_custom_call.1} parent=47 // pred_region
          %s286 = sand.u32 %s30, 1
          %s287 = sand.u32 %s30, 1
          %s288 = smul.addr %s287, 16
          %s289 = scalar_lea.vmem [#allocation3], %s288
          %s290 = smul.addr %s20, 8
          %s291 = scalar_lea.vmem %s0, %s290
          // Predicated region
          $region53: #{tpu_custom_call.1} parent=51 // pred_check
            _
          $region54: #{tpu_custom_call.1} parent=51 // pred_check_branch
            %293 = sbr.rel (0) target = $region56
          $region55: #{tpu_custom_call.1} parent=51 // pred_region
            // Predicated region
            $region57: #{tpu_custom_call.1} parent=55 // pred_check
              _
            $region58: #{tpu_custom_call.1} parent=55 // pred_check_branch
              %295 = sbr.rel (0) target = $region60
            $region59: #{tpu_custom_call.1} parent=55 // pred_region
              // Predicated region
              $region72: #{tpu_custom_call.1} parent=59 // pred_check
                _
              $region73: #{tpu_custom_call.1} parent=59 // pred_check_branch
                %313 = sbr.rel (0) target = $region75
              $region74: #{tpu_custom_call.1} parent=59 // pred_region
                loop: start=0, step=1, limit=1
                $region76: #{tpu_custom_call.1} parent=74 // loop_pre_header
                  _
                $region77: #{tpu_custom_call.1} parent=74 // loop_header
                  %s315 = sphi 0, %s319
                  %p316 = scmp.ge.s32.totalorder %s315, 1
                  %s320 = sphi %s291, %s291
                  %s321 = sphi %s289, %s289
                $region78: #{tpu_custom_call.1} parent=74 // loop_header_branch
                  %318 = sbr.rel (%p316) target = $region82
                $region79: #{tpu_custom_call.1} parent=74 // loop_body
                  %v322 = vld [vmem:[%s320] sm:$0xff]
                  %323 = vst [vmem:[%s321] sm:$0xff] %v322
                  %v324 = vld [vmem:[%s320 + $0x18] sm:$0xff]
                  %325 = vst [vmem:[%s321 + $0x8] sm:$0xff] %v324
                $region80: #{tpu_custom_call.1} parent=74 // loop_footer
                  %s319 = sadd.s32 1, %s315
                $region81: #{tpu_custom_call.1} parent=74 // loop_footer_branch
                  %314 = sbr.rel target = $region77
                $region82: #{tpu_custom_call.1} parent=74 // loop_exit
                  _
              $region75: #{tpu_custom_call.1} parent=59 // pred_fallthru
                _
              // Predicated region
              $region83: #{tpu_custom_call.1} parent=59 // pred_check
                _
              $region84: #{tpu_custom_call.1} parent=59 // pred_check_branch
                %327 = sbr.rel target = $region86
              $region85: #{tpu_custom_call.1} parent=59 // pred_region
                _
              $region86: #{tpu_custom_call.1} parent=59 // pred_fallthru
                _
            $region60: #{tpu_custom_call.1} parent=55 // pred_fallthru
              _
            // Predicated region
            $region61: #{tpu_custom_call.1} parent=55 // pred_check
              _
            $region62: #{tpu_custom_call.1} parent=55 // pred_check_branch
              %297 = sbr.rel target = $region64
            $region63: #{tpu_custom_call.1} parent=55 // pred_region
              %s299 = ssub.s32 256, 1
              loop: start=0, step=1, limit=1
              $region65: #{tpu_custom_call.1} parent=63 // loop_pre_header
                _
              $region66: #{tpu_custom_call.1} parent=63 // loop_header
                %s301 = sphi 0, %s305
                %p302 = scmp.ge.s32.totalorder %s301, 1
                %s306 = sphi %s291, %s291
                %s307 = sphi %s289, %s289
              $region67: #{tpu_custom_call.1} parent=63 // loop_header_branch
                %304 = sbr.rel (%p302) target = $region71
              $region68: #{tpu_custom_call.1} parent=63 // loop_body
                %v308 = vld [vmem:[%s306] sm:%s299]
                %309 = vst [vmem:[%s307] sm:%s299] %v308
                %v310 = vld [vmem:[%s306 + $0x18] sm:%s299]
                %311 = vst [vmem:[%s307 + $0x8] sm:%s299] %v310
              $region69: #{tpu_custom_call.1} parent=63 // loop_footer
                %s305 = sadd.s32 1, %s301
              $region70: #{tpu_custom_call.1} parent=63 // loop_footer_branch
                %300 = sbr.rel target = $region66
              $region71: #{tpu_custom_call.1} parent=63 // loop_exit
                _
            $region64: #{tpu_custom_call.1} parent=55 // pred_fallthru
              _
          $region56: #{tpu_custom_call.1} parent=51 // pred_fallthru
            _
          %328 = vnop
        $region52: #{tpu_custom_call.1} parent=47 // pred_fallthru
          _
      $region48: #{tpu_custom_call.1} parent=5 // pred_fallthru
        _
      %p329 = scmp.le.s32.totalorder 1, %s20
      %p330 = scmp.lt.s32.totalorder %s20, 4
      %p331 = pnand %p329, %p330
      %p332 = pneg %p331
      // Predicated region
      $region87: #{tpu_custom_call.1} parent=5 // pred_check
        _
      $region88: #{tpu_custom_call.1} parent=5 // pred_check_branch
        %334 = sbr.rel (%p331) target = $region90
      $region89: #{tpu_custom_call.1} parent=5 // pred_region
        %s335 = ssub.s32 %s20, 1
        %s336 = sand.u32 %s33, 1
        %s337 = sand.u32 %s33, 1
        %s338 = smul.addr %s337, 16
        %s339 = scalar_lea.vmem [#allocation3], %s338
        // Predicated region
        $region91: #{tpu_custom_call.1} parent=89 // pred_check
          %p340 = pneg %p46
        $region92: #{tpu_custom_call.1} parent=89 // pred_check_branch
          %342 = sbr.rel (%p340) target = $region94
        $region93: #{tpu_custom_call.1} parent=89 // pred_region
          _
        $region94: #{tpu_custom_call.1} parent=89 // pred_fallthru
          _
        %s343 = sand.u32 %s33, 1
        %s344 = sand.u32 %s33, 1
        %s345 = smul.addr %s344, 16
        %s346 = scalar_lea.vmem [#allocation3], %s345
        %p347 = pneg %p46
        %p348 = pneg %p43
        %p349 = pneg %p67
        %p350 = pneg %p64
        %p351 = pneg %p88
        %p352 = pneg %p85
        %p353 = pneg %p109
        %p354 = pneg %p106
        %p355 = pneg %p130
        %p356 = pneg %p127
        %p357 = pneg %p151
        %p358 = pneg %p148
        %p359 = pneg %p172
        %p360 = pneg %p169
        %p361 = pneg %p193
        %p362 = pneg %p190
        %p363 = pneg %p214
        %p364 = pneg %p211
        %p365 = pneg %p240
        %p366 = pneg %p237
        %s367 = sand.u32 %s227, 1
        %s368 = scalar_lea.sflag [#allocation5], %s367
        %s369 = sand.u32 %s227, 1
        %s370 = scalar_lea.vmem [#allocation4], %s369
        %v371 = vld [vmem:[%s339] sm:$0xff]
        %v372 = vld [vmem:[%s339 + $0x8] sm:$0x3]
        %v373 = vld [vmem:[%s1] sm:$0xff]
        %v374 = vld [vmem:[%s1 + $0x8] sm:$0xff]
        %v375 = vld [vmem:[%s1 + $0x10] sm:$0xff]
        %v376 = vld [vmem:[%s1 + $0x18] sm:$0x3f]
        %v377 = vld [vmem:[%s2] sm:$0xff]
        %v378 = vld [vmem:[%s2 + $0x8] sm:$0xff]
        %v379 = vld [vmem:[%s2 + $0x10] sm:$0xff]
        %v380 = vld [vmem:[%s2 + $0x18] sm:$0x3f]
        %382 = vset.pattern.permute.xlu0 0
        %383 = vperm.xlu0 %382, %v377
        %v384 = vpop.permute.xlu0 %383
        %387 = vset.pattern.permute.xlu0 0
        %388 = vperm.xlu0 %387, %v378
        %v389 = vpop.permute.xlu0 %388
        %392 = vset.pattern.permute.xlu0 0
        %393 = vperm.xlu0 %392, %v379
        %v394 = vpop.permute.xlu0 %393
        %397 = vset.pattern.permute.xlu0 0
        %398 = vperm.xlu0 %397, %v380
        %v399 = vpop.permute.xlu0 %398
        %vm401 = vcmask 80896
        %v403 = vsel %vm401, %v373, 0
        %v406 = vsel %vm401, %v374, 0
        %v409 = vsel %vm401, %v375, 0
        %v412 = vsel %vm401, %v376, 0
        %vm414 = vcmask 1041408
        %v416 = vsel %vm414, %v372, 0
        %418 = vmatpush.msra.mxu0 0.0
        %419 = vmatpush.msra.mxu0 0.0
        %420 = vmatpush.msra.mxu0 0.0
        %421 = vmatpush.msra.mxu0 0.0
        %422 = vmatpush.msra.mxu0 0.0
        %423 = vmatpush.msra.mxu0 0.0
        %424 = vmatpush.msra.mxu0 0.0
        %425 = vmatpush.msra.mxu0 0.0
        %426 = vmatpush.msra.mxu0 0.0
        %427 = vmatpush.msra.mxu0 0.0
        %428 = vmatpush.msra.mxu0 0.0
        %429 = vmatpush.msra.mxu0 0.0
        %430 = vmatpush.msra.mxu0 0.0
        %431 = vmatpush.msra.mxu0 0.0
        %432 = vmatpush.msra.mxu0 %v416
        %433 = vmatpush.msra.mxu0 %v371
        %434 = vmatmul.f32.gmra.mxu0 %v403
        %v435 = vpop.f32.mrf.mxu0
        %v436 = vadd.f32 %v384, %v435
        %437 = vmatmul.f32.gmra.mxu0 %v406
        %v438 = vpop.f32.mrf.mxu0
        %v439 = vadd.f32 %v389, %v438
        %440 = vmatmul.f32.gmra.mxu0 %v409
        %v441 = vpop.f32.mrf.mxu0
        %v442 = vadd.f32 %v394, %v441
        %443 = vmatmul.f32.gmra.mxu0 %v412
        %v444 = vpop.f32.mrf.mxu0
        %v445 = vadd.f32 %v399, %v444
        %446 = vdwg.mxu0
        %v447 = vand.u32 2147483647, %v436
        %v448 = vand.u32 2147483647, %v439
        %v449 = vand.u32 2147483647, %v442
        %v450 = vand.u32 2147483647, %v445
        %v451 = vmul.f32 %v447, 3.0
        %v452 = vmul.f32 %v448, 3.0
        %v453 = vmul.f32 %v449, 3.0
        %v454 = vmul.f32 %v450, 3.0
        %v455 = vmax.f32 %v436, 0.0
        %v456 = vmax.f32 %v439, 0.0
        %v457 = vmax.f32 %v442, 0.0
        %v458 = vmax.f32 %v445, 0.0
        %v459 = vsub.f32 0.0, %v451
        %v460 = vsub.f32 0.0, %v452
        %v461 = vsub.f32 0.0, %v453
        %v462 = vsub.f32 0.0, %v454
        %v463 = vmul.f32 %v459, 1.442695
        %v464 = vpow.pop %v463
        %v465 = vmul.f32 %v460, 1.442695
        %v466 = vpow.pop %v465
        %v467 = vmul.f32 %v461, 1.442695
        %v468 = vpow.pop %v467
        %v469 = vmul.f32 %v462, 1.442695
        %v470 = vpow.pop %v469
        %v471 = vadd.f32 %v464, 1.0
        %v472 = vlog2.pop %v471
        %v473 = vmul.f32 %v472, 0.6931472
        %v474 = vmul.f32 -0.5, %v464
        %v475 = vadd.f32 %v474, 1.0
        %v476 = vmul.f32 %v475, %v464
        %v477 = vand.u32 2147483647, %v464
        %vm478 = vcmp.lt.f32.partialorder %v477, 0.0004427343
        %v479 = vsel %vm478, %v476, %v473
        %v480 = vadd.f32 %v466, 1.0
        %v481 = vlog2.pop %v480
        %v482 = vmul.f32 %v481, 0.6931472
        %v483 = vmul.f32 -0.5, %v466
        %v484 = vadd.f32 %v483, 1.0
        %v485 = vmul.f32 %v484, %v466
        %v486 = vand.u32 2147483647, %v466
        %vm487 = vcmp.lt.f32.partialorder %v486, 0.0004427343
        %v488 = vsel %vm487, %v485, %v482
        %v489 = vadd.f32 %v468, 1.0
        %v490 = vlog2.pop %v489
        %v491 = vmul.f32 %v490, 0.6931472
        %v492 = vmul.f32 -0.5, %v468
        %v493 = vadd.f32 %v492, 1.0
        %v494 = vmul.f32 %v493, %v468
        %v495 = vand.u32 2147483647, %v468
        %vm496 = vcmp.lt.f32.partialorder %v495, 0.0004427343
        %v497 = vsel %vm496, %v494, %v491
        %v498 = vadd.f32 %v470, 1.0
        %v499 = vlog2.pop %v498
        %v500 = vmul.f32 %v499, 0.6931472
        %v501 = vmul.f32 -0.5, %v470
        %v502 = vadd.f32 %v501, 1.0
        %v503 = vmul.f32 %v502, %v470
        %v504 = vand.u32 2147483647, %v470
        %vm505 = vcmp.lt.f32.partialorder %v504, 0.0004427343
        %v506 = vsel %vm505, %v503, %v500
        %v507 = vmul.f32 %v479, 0.33333334
        %v508 = vmul.f32 %v488, 0.33333334
        %v509 = vmul.f32 %v497, 0.33333334
        %v510 = vmul.f32 %v506, 0.33333334
        %v511 = vadd.f32 %v455, %v507
        %v512 = vadd.f32 %v456, %v508
        %v513 = vadd.f32 %v457, %v509
        %v514 = vadd.f32 %v458, %v510
        %v515 = vld [vmem:[%s3] sm:$0xff]
        %v516 = vld [vmem:[%s3 + $0x8] sm:$0xff]
        %v517 = vld [vmem:[%s3 + $0x10] sm:$0xf]
        %v518 = vld [vmem:[%s4] sm:$0xff]
        %v519 = vld [vmem:[%s4 + $0x8] sm:$0xff]
        %v520 = vld [vmem:[%s4 + $0x10] sm:$0xf]
        %522 = vset.pattern.permute.xlu0 0
        %523 = vperm.xlu0 %522, %v518
        %v524 = vpop.permute.xlu0 %523
        %527 = vset.pattern.permute.xlu0 0
        %528 = vperm.xlu0 %527, %v519
        %v529 = vpop.permute.xlu0 %528
        %532 = vset.pattern.permute.xlu0 0
        %533 = vperm.xlu0 %532, %v520
        %v534 = vpop.permute.xlu0 %533
        %vm536 = vcmask 244736
        %v538 = vsel %vm536, %v515, 0
        %v541 = vsel %vm536, %v516, 0
        %v544 = vsel %vm536, %v517, 0
        %vm546 = vcmask 1045504
        %v548 = vsel %vm546, %v514, 0
        %550 = vmatpush.msra.mxu0 0.0
        %551 = vmatpush.msra.mxu0 0.0
        %552 = vmatpush.msra.mxu0 0.0
        %553 = vmatpush.msra.mxu0 0.0
        %554 = vmatpush.msra.mxu0 0.0
        %555 = vmatpush.msra.mxu0 0.0
        %556 = vmatpush.msra.mxu0 0.0
        %557 = vmatpush.msra.mxu0 0.0
        %558 = vmatpush.msra.mxu0 0.0
        %559 = vmatpush.msra.mxu0 0.0
        %560 = vmatpush.msra.mxu0 0.0
        %561 = vmatpush.msra.mxu0 0.0
        %562 = vmatpush.msra.mxu0 %v548
        %563 = vmatpush.msra.mxu0 %v513
        %564 = vmatpush.msra.mxu0 %v512
        %565 = vmatpush.msra.mxu0 %v511
        %566 = vmatmul.f32.gmra.mxu0 %v538
        %v567 = vpop.f32.mrf.mxu0
        %v568 = vadd.f32 %v524, %v567
        %569 = vmatmul.f32.gmra.mxu0 %v541
        %v570 = vpop.f32.mrf.mxu0
        %v571 = vadd.f32 %v529, %v570
        %572 = vmatmul.f32.gmra.mxu0 %v544
        %v573 = vpop.f32.mrf.mxu0
        %v574 = vadd.f32 %v534, %v573
        %575 = vdwg.mxu0
        %v576 = vand.u32 2147483647, %v568
        %v577 = vand.u32 2147483647, %v571
        %v578 = vand.u32 2147483647, %v574
        %v579 = vmul.f32 %v576, 3.0
        %v580 = vmul.f32 %v577, 3.0
        %v581 = vmul.f32 %v578, 3.0
        %v582 = vmax.f32 %v568, 0.0
        %v583 = vmax.f32 %v571, 0.0
        %v584 = vmax.f32 %v574, 0.0
        %v585 = vsub.f32 0.0, %v579
        %v586 = vsub.f32 0.0, %v580
        %v587 = vsub.f32 0.0, %v581
        %v588 = vmul.f32 %v585, 1.442695
        %v589 = vpow.pop %v588
        %v590 = vmul.f32 %v586, 1.442695
        %v591 = vpow.pop %v590
        %v592 = vmul.f32 %v587, 1.442695
        %v593 = vpow.pop %v592
        %v594 = vadd.f32 %v589, 1.0
        %v595 = vlog2.pop %v594
        %v596 = vmul.f32 %v595, 0.6931472
        %v597 = vmul.f32 -0.5, %v589
        %v598 = vadd.f32 %v597, 1.0
        %v599 = vmul.f32 %v598, %v589
        %v600 = vand.u32 2147483647, %v589
        %vm601 = vcmp.lt.f32.partialorder %v600, 0.0004427343
        %v602 = vsel %vm601, %v599, %v596
        %v603 = vadd.f32 %v591, 1.0
        %v604 = vlog2.pop %v603
        %v605 = vmul.f32 %v604, 0.6931472
        %v606 = vmul.f32 -0.5, %v591
        %v607 = vadd.f32 %v606, 1.0
        %v608 = vmul.f32 %v607, %v591
        %v609 = vand.u32 2147483647, %v591
        %vm610 = vcmp.lt.f32.partialorder %v609, 0.0004427343
        %v611 = vsel %vm610, %v608, %v605
        %v612 = vadd.f32 %v593, 1.0
        %v613 = vlog2.pop %v612
        %v614 = vmul.f32 %v613, 0.6931472
        %v615 = vmul.f32 -0.5, %v593
        %v616 = vadd.f32 %v615, 1.0
        %v617 = vmul.f32 %v616, %v593
        %v618 = vand.u32 2147483647, %v593
        %vm619 = vcmp.lt.f32.partialorder %v618, 0.0004427343
        %v620 = vsel %vm619, %v617, %v614
        %v621 = vmul.f32 %v602, 0.33333334
        %v622 = vmul.f32 %v611, 0.33333334
        %v623 = vmul.f32 %v620, 0.33333334
        %v624 = vadd.f32 %v582, %v621
        %v625 = vadd.f32 %v583, %v622
        %v626 = vadd.f32 %v584, %v623
        %v627 = vld [vmem:[%s5] sm:$0xff]
        %v628 = vld [vmem:[%s5 + $0x8] sm:$0x3]
        %v629 = vld [vmem:[%s6] sm:$0xff]
        %v630 = vld [vmem:[%s6 + $0x8] sm:$0x3]
        %632 = vset.pattern.permute.xlu0 0
        %633 = vperm.xlu0 %632, %v629
        %v634 = vpop.permute.xlu0 %633
        %637 = vset.pattern.permute.xlu0 0
        %638 = vperm.xlu0 %637, %v630
        %v639 = vpop.permute.xlu0 %638
        %vm641 = vcmask 162816
        %v643 = vsel %vm641, %v627, 0
        %v646 = vsel %vm641, %v628, 0
        %vm648 = vcmask 1043456
        %v650 = vsel %vm648, %v626, 0
        %652 = vmatpush.msra.mxu0 0.0
        %653 = vmatpush.msra.mxu0 0.0
        %654 = vmatpush.msra.mxu0 0.0
        %655 = vmatpush.msra.mxu0 0.0
        %656 = vmatpush.msra.mxu0 0.0
        %657 = vmatpush.msra.mxu0 0.0
        %658 = vmatpush.msra.mxu0 0.0
        %659 = vmatpush.msra.mxu0 0.0
        %660 = vmatpush.msra.mxu0 0.0
        %661 = vmatpush.msra.mxu0 0.0
        %662 = vmatpush.msra.mxu0 0.0
        %663 = vmatpush.msra.mxu0 0.0
        %664 = vmatpush.msra.mxu0 0.0
        %665 = vmatpush.msra.mxu0 %v650
        %666 = vmatpush.msra.mxu0 %v625
        %667 = vmatpush.msra.mxu0 %v624
        %668 = vmatmul.f32.gmra.mxu0 %v643
        %v669 = vpop.f32.mrf.mxu0
        %v670 = vadd.f32 %v634, %v669
        %671 = vmatmul.f32.gmra.mxu0 %v646
        %v672 = vpop.f32.mrf.mxu0
        %v673 = vadd.f32 %v639, %v672
        %674 = vdwg.mxu0
        %v675 = vand.u32 2147483647, %v670
        %v676 = vand.u32 2147483647, %v673
        %v677 = vmul.f32 %v675, 3.0
        %v678 = vmul.f32 %v676, 3.0
        %v679 = vmax.f32 %v670, 0.0
        %v680 = vmax.f32 %v673, 0.0
        %v681 = vsub.f32 0.0, %v677
        %v682 = vsub.f32 0.0, %v678
        %v683 = vmul.f32 %v681, 1.442695
        %v684 = vpow.pop %v683
        %v685 = vmul.f32 %v682, 1.442695
        %v686 = vpow.pop %v685
        %v687 = vadd.f32 %v684, 1.0
        %v688 = vlog2.pop %v687
        %v689 = vmul.f32 %v688, 0.6931472
        %v690 = vmul.f32 -0.5, %v684
        %v691 = vadd.f32 %v690, 1.0
        %v692 = vmul.f32 %v691, %v684
        %v693 = vand.u32 2147483647, %v684
        %vm694 = vcmp.lt.f32.partialorder %v693, 0.0004427343
        %v695 = vsel %vm694, %v692, %v689
        %v696 = vadd.f32 %v686, 1.0
        %v697 = vlog2.pop %v696
        %v698 = vmul.f32 %v697, 0.6931472
        %v699 = vmul.f32 -0.5, %v686
        %v700 = vadd.f32 %v699, 1.0
        %v701 = vmul.f32 %v700, %v686
        %v702 = vand.u32 2147483647, %v686
        %vm703 = vcmp.lt.f32.partialorder %v702, 0.0004427343
        %v704 = vsel %vm703, %v701, %v698
        %v705 = vmul.f32 %v695, 0.33333334
        %v706 = vmul.f32 %v704, 0.33333334
        %v707 = vadd.f32 %v679, %v705
        %v708 = vadd.f32 %v680, %v706
        %v709 = vld [vmem:[%s7] sm:$0x1]
        %v710 = vld [vmem:[#allocation2] sm:$0x1]
        %712 = vset.pattern.permute.xlu0 0
        %713 = vperm.xlu0 %712, %v710
        %v714 = vpop.permute.xlu0 %713
        %v716 = vperm.slane %v714, 0
        %v718 = vsel %vm401, %v709, 0
        %v721 = vsel %vm414, %v708, 0
        %723 = vmatpush.msra.mxu0 0.0
        %724 = vmatpush.msra.mxu0 0.0
        %725 = vmatpush.msra.mxu0 0.0
        %726 = vmatpush.msra.mxu0 0.0
        %727 = vmatpush.msra.mxu0 0.0
        %728 = vmatpush.msra.mxu0 0.0
        %729 = vmatpush.msra.mxu0 0.0
        %730 = vmatpush.msra.mxu0 0.0
        %731 = vmatpush.msra.mxu0 0.0
        %732 = vmatpush.msra.mxu0 0.0
        %733 = vmatpush.msra.mxu0 0.0
        %734 = vmatpush.msra.mxu0 0.0
        %735 = vmatpush.msra.mxu0 0.0
        %736 = vmatpush.msra.mxu0 0.0
        %737 = vmatpush.msra.mxu0 %v721
        %738 = vmatpush.msra.mxu0 %v707
        %739 = vmatmul.f32.gmra.mxu0 %v718
        %v740 = vpop.f32.mrf.mxu0
        %v741 = vadd.f32 %v716, %v740
        %742 = vdwg.mxu0
        %743 = vst [vmem:[%s370] sm:$0x1] %v741
        %s744 = sand.u32 %s227, 1
        %s745 = scalar_lea.sflag [#allocation5], %s744
        %s746 = sand.u32 %s227, 1
        %s747 = scalar_lea.vmem [#allocation4], %s746
        // Predicated region
        $region95: #{tpu_custom_call.1} parent=89 // pred_check
          %p748 = pneg %p237
        $region96: #{tpu_custom_call.1} parent=89 // pred_check_branch
          %750 = sbr.rel (%p748) target = $region98
        $region97: #{tpu_custom_call.1} parent=89 // pred_region
          %752 = vsyncadd %s745, 0
          %s753 = scalar_lea.hbm %s9, %s25
          %s755 = sshll.u32 %s747, 4
          %s756 = int_to_ptr.vmem [resolvable:$true] %s755
          %s757 = sshll.u32 %s753, 4
          %s758 = int_to_ptr.hbm [resolvable:$true] %s757
          %760 = dma.vmem_to_hbm [thread:$0]  %s756, 16, %s758, %s745
        $region98: #{tpu_custom_call.1} parent=89 // pred_fallthru
          _
      $region90: #{tpu_custom_call.1} parent=5 // pred_fallthru
        _
      %p761 = scmp.le.s32.totalorder 2, %s20
      // Predicated region
      $region99: #{tpu_custom_call.1} parent=5 // pred_check
        %p762 = pneg %p761
      $region100: #{tpu_custom_call.1} parent=5 // pred_check_branch
        %764 = sbr.rel (%p762) target = $region102
      $region101: #{tpu_custom_call.1} parent=5 // pred_region
        %s765 = ssub.s32 %s20, 2
        // Predicated region
        $region103: #{tpu_custom_call.1} parent=101 // pred_check
          %p766 = pneg %p243
        $region104: #{tpu_custom_call.1} parent=101 // pred_check_branch
          %768 = sbr.rel (%p766) target = $region106
        $region105: #{tpu_custom_call.1} parent=101 // pred_region
          %s769 = sand.u32 %s228, 1
          %s770 = scalar_lea.sflag [#allocation5], %s769
          %s771 = sand.u32 %s228, 1
          %s772 = scalar_lea.vmem [#allocation4], %s771
          %774 = dma.done %s770, 16
        $region106: #{tpu_custom_call.1} parent=101 // pred_fallthru
          _
      $region102: #{tpu_custom_call.1} parent=5 // pred_fallthru
        _
    $region6: #{tpu_custom_call.1} parent=1 // loop_footer
      %s24 = sadd.s32 1, %s20
    $region7: #{tpu_custom_call.1} parent=1 // loop_footer_branch
      %19 = sbr.rel target = $region3
    $region8: #{tpu_custom_call.1} parent=1 // loop_exit
      _
    %775 = vsyncpa [#allocation5], 1
    %s776 = scalar_lea.sflag [#allocation5], 1
    %777 = vsyncpa %s776, 1

</llo_original>
